<compile_context>
chip_gen: v7x
topology: tpu7x:2x2x1
jax: 0.10.0
libtpu: 0.0.40
codegen_flags: <defaults>
</compile_context>

<pallas_src>
import jax
import jax.numpy as jnp
from jax.experimental import pallas as pl
from jax.experimental.pallas import tpu as pltpu


def _upsample_conv_kernel(x_ref, w_ref, b_ref, o_ref):
    """One (batch, row-parity, row-strip) step of fused 2x-upsample + 3x3 conv.

    x_ref: (1, H+2, W+2, C)    zero-padded ORIGINAL-resolution NHWC input, resident
                               in VMEM (same block for every step of a batch element)
    w_ref: (1, 2, 4*C, C)      merged transposed-conv weights for this row parity;
                               dim 1 = column parity, K axis ordered (dh, dw, cin)
    b_ref: (1, C)              bias
    o_ref: (1, TH, 1, W, 2*C)  output strip; last axis packs (col-parity, cout)
    """
    TH = o_ref.shape[1]
    W = o_ref.shape[3]
    C = o_ref.shape[4] // 2

    a = pl.program_id(1)                 # output row parity (0 = even rows, 1 = odd)
    i_tile = pl.program_id(2)            # row-strip index
    row0 = i_tile * TH + a               # first padded-input row needed by this strip

    xs = x_ref[0, pl.ds(row0, TH + 1), :, :]          # (TH+1, W+2, C): strip + 1-row halo
    bias = b_ref[0].astype(jnp.float32)               # (C,)

    for b in range(2):                   # output column parity
        # im2col over the 2x2 original-pixel neighborhood -> single matmul, K = 4*C
        taps = [xs[dh:dh + TH, b + dw:b + dw + W, :]
                for dh in range(2) for dw in range(2)]
        patch = jnp.concatenate(taps, axis=-1).reshape(TH * W, 4 * C)
        acc = jnp.dot(patch, w_ref[0, b],
                      preferred_element_type=jnp.float32)      # (TH*W, C)
        res = (acc + bias).reshape(TH, W, C)
        o_ref[0, :, 0, :, b * C:(b + 1) * C] = res.astype(o_ref.dtype)


def _merge_upsample_conv_weights(weight_oihw):
    """(C, C, 3, 3) OIHW conv weight -> (2, 2, 4*C, C) merged transposed-conv weights.

    W[a, b] is the ((dh, dw, cin), cout) matrix such that
      out[2i+a, 2j+b, co] = sum_{dh,dw,ci} x_pad[i+a+dh, j+b+dw, ci] * W[a, b, (dh,dw,ci), co]
    with x_pad = original image zero-padded by 1 pixel.  Uses adds only (exact).
    """
    wt = jnp.transpose(weight_oihw, (2, 3, 1, 0))     # (kh, kw, cin, cout)
    cin, cout = wt.shape[2], wt.shape[3]

    def merge2(v0, v1, v2):
        # parity 0 groups: ({0}, {1,2});  parity 1 groups: ({0,1}, {2})
        return ((v0, v1 + v2), (v0 + v1, v2))

    row_m = merge2(wt[0], wt[1], wt[2])               # row_m[a][dh]: (3, cin, cout) over kw
    planes = []
    for a in range(2):
        per_b = []
        for b in range(2):
            taps = []
            for dh in range(2):
                wr = row_m[a][dh]
                col_m = merge2(wr[0], wr[1], wr[2])
                for dw in range(2):
                    taps.append(col_m[b][dw])          # (cin, cout)
            per_b.append(jnp.stack(taps, axis=0).reshape(4 * cin, cout))
        planes.append(jnp.stack(per_b, axis=0))
    return jnp.stack(planes, axis=0)                   # (2, 2, 4*cin, cout)


def _pick_tile_h(H, W, C, itemsize):
    """Largest divisor of H whose per-step VMEM working set stays modest."""
    budget = 6 * 1024 * 1024
    # per output-row bytes: 2 im2col patches (4*W*C f32), 2 f32 accs, stored strip
    per_row = (8 * W * C + 2 * W * C) * 4 + 2 * W * C * itemsize
    for th in range(H, 0, -1):
        if H % th == 0 and th * per_row <= budget:
            return th
    return 1


def upsample_forward(x_nchw, weight_oihw, bias, *, tile_h=None):
    """PyTorch Upsample.forward equivalent: nearest 2x upsample then Conv2d(C, C, 3, pad=1).

    x_nchw: (B, C, H, W), weight_oihw: (C, C, 3, 3), bias: (C,) -> (B, C, 2H, 2W)
    """
    B, C, H, W = x_nchw.shape
    Hu, Wu = 2 * H, 2 * W

    # NCHW -> NHWC and zero-pad the ORIGINAL-resolution image by 1 pixel (cheap,
    # 1x-sized tensor).  The 4x-larger upsampled image is never built.
    x_nhwc = jnp.transpose(x_nchw, (0, 2, 3, 1))
    x_pad = jnp.pad(x_nhwc, ((0, 0), (1, 1), (1, 1), (0, 0)))

    w_merged = _merge_upsample_conv_weights(weight_oihw).astype(x_nchw.dtype)
    b2 = bias.reshape(1, C)

    th = tile_h if tile_h is not None else _pick_tile_h(H, W, C, x_nchw.dtype.itemsize)
    if H % th != 0:
        raise ValueError(f"tile_h={th} must divide H={H}")
    n_h = H // th

    # Output laid out as (B, H, 2, W, 2*C): axes (row-parity, col-parity*cout) so a
    # plain contiguous reshape afterwards interleaves even/odd rows & cols for free.
    # TODO(synk): for very large C (e.g. 1280) also tile Cout via a 4th grid axis so
    # weight/output blocks stay under the v7x 64 MiB VMEM budget.
    out5 = pl.pallas_call(
        _upsample_conv_kernel,
        out_shape=jax.ShapeDtypeStruct((B, H, 2, W, 2 * C), x_nchw.dtype),
        grid_spec=pltpu.PrefetchScalarGridSpec(
            num_scalar_prefetch=0,
            grid=(B, 2, n_h),            # (batch, row parity, row strip)
            in_specs=[
                # whole padded input plane; block index constant across parity/strip
                # steps -> DMA'd once per batch element and kept resident in VMEM
                pl.BlockSpec((1, H + 2, W + 2, C), lambda n, a, i: (n, 0, 0, 0)),
                # only the weights of the current row parity
                pl.BlockSpec((1, 2, 4 * C, C), lambda n, a, i: (a, 0, 0, 0)),
                pl.BlockSpec((1, C), lambda n, a, i: (0, 0)),
            ],
            out_specs=pl.BlockSpec((1, th, 1, W, 2 * C),
                                   lambda n, a, i: (n, i, a, 0, 0)),
        ),
        compiler_params=pltpu.CompilerParams(
            dimension_semantics=("parallel", "parallel", "parallel")),
    )(x_pad, w_merged, b2)

    out_nhwc = out5.reshape(B, Hu, Wu, C)   # contiguous merge -> free
    # TODO(synk): if the consumer can take NHWC, drop this transpose (it is one extra
    # HBM pass over the 4x-sized output, kept only to match the NCHW interface).
    return jnp.transpose(out_nhwc, (0, 3, 1, 2))


def _reference(x_nchw, weight_oihw, bias):
    """Pure-JAX reference (explicit upsample + lax conv) for correctness checking."""
    B, C, H, W = x_nchw.shape
    x = jnp.reshape(x_nchw, (B, C, H, 1, W, 1))
    x = jnp.broadcast_to(x, (B, C, H, 2, W, 2)).reshape(B, C, 2 * H, 2 * W)
    out = jax.lax.conv_general_dilated(
        x, weight_oihw, window_strides=(1, 1), padding=((1, 1), (1, 1)),
        dimension_numbers=("NCHW", "OIHW", "NCHW"),
        precision=jax.lax.Precision.HIGHEST)
    return out + bias.reshape(1, C, 1, 1)


if __name__ == "__main__":
    fwd = jax.jit(upsample_forward, static_argnames=("tile_h",))

    def _run_case(key, B, C, H, W, tile_h):
        kx, kw, kb = jax.random.split(key, 3)
        x = jax.random.normal(kx, (B, C, H, W), dtype=jnp.float32)
        bound = 1.0 / (C * 3 * 3) ** 0.5          # Conv2d-like init
        weight = jax.random.uniform(kw, (C, C, 3, 3), minval=-bound, maxval=bound,
                                    dtype=jnp.float32)
        bias = jax.random.uniform(kb, (C,), minval=-bound, maxval=bound,
                                  dtype=jnp.float32)
        out = jax.block_until_ready(fwd(x, weight, bias, tile_h=tile_h))
        ref = _reference(x, weight, bias)
        assert out.shape == (B, C, 2 * H, 2 * W), out.shape
        # merged-weight summation order differs slightly from the 9-tap reference
        assert jnp.allclose(out, ref, atol=1e-4, rtol=1e-4), (
            f"mismatch vs reference, max abs err = {jnp.max(jnp.abs(out - ref))}")

    key = jax.random.PRNGKey(0)
    k1, k2, k3 = jax.random.split(key, 3)
    _run_case(k1, B=2, C=4, H=16, W=16, tile_h=8)     # tiled row strips (halo path)
    _run_case(k2, B=2, C=4, H=16, W=16, tile_h=None)  # auto tile size
    _run_case(k3, B=1, C=8, H=8, W=16, tile_h=4)      # non-square spatial
    print("KERNEL_OK")
</pallas_src>

<mosaic_0001>
module attributes {stable_mosaic.version = 11 : i64} {
  func.func @_upsample_conv_kernel(%arg0: i32, %arg1: i32, %arg2: i32, %arg3: memref<1x18x18x4xf32, #tpu.memory_space<vmem>>, %arg4: memref<1x2x16x4xf32, #tpu.memory_space<vmem>>, %arg5: memref<1x4xf32, #tpu.memory_space<vmem>>, %arg6: memref<1x8x1x16x8xf32, #tpu.memory_space<vmem>>) attributes {dimension_semantics = [#tpu.dimension_semantics<parallel>, #tpu.dimension_semantics<parallel>, #tpu.dimension_semantics<parallel>], iteration_bounds = array<i64: 2, 2, 2>, scalar_prefetch = 0 : i64, scratch_operands = 0 : i64, tpu.core_type = #tpu.core_type<tc>, window_params = [{transform_indices = @transform_0, window_bounds = array<i64: 1, 18, 18, 4>}, {transform_indices = @transform_1, window_bounds = array<i64: 1, 2, 16, 4>}, {pipeline_mode = #tpu.pipeline_mode<synchronous>, transform_indices = @transform_2, window_bounds = array<i64: 1, 4>}, {transform_indices = @transform_3, window_bounds = array<i64: 1, 8, 1, 16, 8>}]} {
    %c8_i32 = arith.constant 8 : i32
    %0 = arith.muli %arg2, %c8_i32 : i32
    %1 = arith.addi %0, %arg1 : i32
    %c0 = arith.constant 0 : index
    %2 = arith.index_cast %1 : i32 to index
    %c0_0 = arith.constant 0 : index
    %c0_1 = arith.constant 0 : index
    %3 = vector.load %arg3[%c0, %2, %c0_0, %c0_1] : memref<1x18x18x4xf32, #tpu.memory_space<vmem>>, vector<1x9x18x4xf32>
    %4 = vector.shape_cast %3 : vector<1x9x18x4xf32> to vector<9x18x4xf32>
    %c0_2 = arith.constant 0 : index
    %c0_3 = arith.constant 0 : index
    %5 = vector.load %arg5[%c0_2, %c0_3] : memref<1x4xf32, #tpu.memory_space<vmem>>, vector<1x4xf32>
    %6 = vector.shape_cast %5 : vector<1x4xf32> to vector<4xf32>
    %7 = vector.extract_strided_slice %4 {offsets = [0, 0, 0], sizes = [8, 16, 4], strides = [1, 1, 1]} : vector<9x18x4xf32> to vector<8x16x4xf32>
    %8 = vector.extract_strided_slice %4 {offsets = [0, 1, 0], sizes = [8, 16, 4], strides = [1, 1, 1]} : vector<9x18x4xf32> to vector<8x16x4xf32>
    %9 = vector.extract_strided_slice %4 {offsets = [1, 0, 0], sizes = [8, 16, 4], strides = [1, 1, 1]} : vector<9x18x4xf32> to vector<8x16x4xf32>
    %10 = vector.extract_strided_slice %4 {offsets = [1, 1, 0], sizes = [8, 16, 4], strides = [1, 1, 1]} : vector<9x18x4xf32> to vector<8x16x4xf32>
    %11 = tpu.concatenate %7, %8, %9, %10 in 2 : vector<8x16x4xf32>, vector<8x16x4xf32>, vector<8x16x4xf32>, vector<8x16x4xf32> -> vector<8x16x16xf32>
    %12 = vector.shape_cast %11 : vector<8x16x16xf32> to vector<128x16xf32>
    %c0_4 = arith.constant 0 : index
    %c0_5 = arith.constant 0 : index
    %c0_6 = arith.constant 0 : index
    %c0_7 = arith.constant 0 : index
    %13 = vector.load %arg4[%c0_4, %c0_5, %c0_6, %c0_7] : memref<1x2x16x4xf32, #tpu.memory_space<vmem>>, vector<1x1x16x4xf32>
    %14 = vector.shape_cast %13 : vector<1x1x16x4xf32> to vector<16x4xf32>
    %cst = arith.constant dense<0.000000e+00> : vector<128x4xf32>
    %15 = tpu.matmul %12, %14, %cst {dimension_numbers = #tpu.dot_dimension_numbers<[1], [0], [0], [1], [0, 0, 1, 1], [], []>} : vector<128x16xf32>, vector<16x4xf32>, vector<128x4xf32> -> vector<128x4xf32>
    %16 = vector.shape_cast %6 : vector<4xf32> to vector<1x4xf32>
    %17 = vector.broadcast %16 : vector<1x4xf32> to vector<128x4xf32>
    %18 = arith.addf %15, %17 : vector<128x4xf32>
    %19 = vector.shape_cast %18 : vector<128x4xf32> to vector<8x16x4xf32>
    %c0_8 = arith.constant 0 : index
    %c0_9 = arith.constant 0 : index
    %c0_10 = arith.constant 0 : index
    %c0_11 = arith.constant 0 : index
    %c0_12 = arith.constant 0 : index
    %20 = vector.load %arg6[%c0_8, %c0_9, %c0_10, %c0_11, %c0_12] : memref<1x8x1x16x8xf32, #tpu.memory_space<vmem>>, vector<1x8x1x16x4xf32>
    %21 = vector.shape_cast %20 : vector<1x8x1x16x4xf32> to vector<8x16x4xf32>
    %22 = vector.shape_cast %19 : vector<8x16x4xf32> to vector<1x8x1x16x4xf32>
    tpu.vector_store %arg6[%c0_8, %c0_9, %c0_10, %c0_11, %c0_12], %22 {strides = array<i32>} : memref<1x8x1x16x8xf32, #tpu.memory_space<vmem>>, vector<1x8x1x16x4xf32>,
    %23 = vector.extract_strided_slice %4 {offsets = [0, 1, 0], sizes = [8, 16, 4], strides = [1, 1, 1]} : vector<9x18x4xf32> to vector<8x16x4xf32>
    %24 = vector.extract_strided_slice %4 {offsets = [0, 2, 0], sizes = [8, 16, 4], strides = [1, 1, 1]} : vector<9x18x4xf32> to vector<8x16x4xf32>
    %25 = vector.extract_strided_slice %4 {offsets = [1, 1, 0], sizes = [8, 16, 4], strides = [1, 1, 1]} : vector<9x18x4xf32> to vector<8x16x4xf32>
    %26 = vector.extract_strided_slice %4 {offsets = [1, 2, 0], sizes = [8, 16, 4], strides = [1, 1, 1]} : vector<9x18x4xf32> to vector<8x16x4xf32>
    %27 = tpu.concatenate %23, %24, %25, %26 in 2 : vector<8x16x4xf32>, vector<8x16x4xf32>, vector<8x16x4xf32>, vector<8x16x4xf32> -> vector<8x16x16xf32>
    %28 = vector.shape_cast %27 : vector<8x16x16xf32> to vector<128x16xf32>
    %c0_13 = arith.constant 0 : index
    %c1 = arith.constant 1 : index
    %c0_14 = arith.constant 0 : index
    %c0_15 = arith.constant 0 : index
    %29 = vector.load %arg4[%c0_13, %c1, %c0_14, %c0_15] : memref<1x2x16x4xf32, #tpu.memory_space<vmem>>, vector<1x1x16x4xf32>
    %30 = vector.shape_cast %29 : vector<1x1x16x4xf32> to vector<16x4xf32>
    %cst_16 = arith.constant dense<0.000000e+00> : vector<128x4xf32>
    %31 = tpu.matmul %28, %30, %cst_16 {dimension_numbers = #tpu.dot_dimension_numbers<[1], [0], [0], [1], [0, 0, 1, 1], [], []>} : vector<128x16xf32>, vector<16x4xf32>, vector<128x4xf32> -> vector<128x4xf32>
    %32 = vector.shape_cast %6 : vector<4xf32> to vector<1x4xf32>
    %33 = vector.broadcast %32 : vector<1x4xf32> to vector<128x4xf32>
    %34 = arith.addf %31, %33 : vector<128x4xf32>
    %35 = vector.shape_cast %34 : vector<128x4xf32> to vector<8x16x4xf32>
    %c0_17 = arith.constant 0 : index
    %c0_18 = arith.constant 0 : index
    %c0_19 = arith.constant 0 : index
    %c0_20 = arith.constant 0 : index
    %c4 = arith.constant 4 : index
    %36 = vector.load %arg6[%c0_17, %c0_18, %c0_19, %c0_20, %c4] : memref<1x8x1x16x8xf32, #tpu.memory_space<vmem>>, vector<1x8x1x16x4xf32>
    %37 = vector.shape_cast %36 : vector<1x8x1x16x4xf32> to vector<8x16x4xf32>
    %38 = vector.shape_cast %35 : vector<8x16x4xf32> to vector<1x8x1x16x4xf32>
    tpu.vector_store %arg6[%c0_17, %c0_18, %c0_19, %c0_20, %c4], %38 {strides = array<i32>} : memref<1x8x1x16x8xf32, #tpu.memory_space<vmem>>, vector<1x8x1x16x4xf32>,
    return
  }
  func.func @transform_0(%arg0: i32, %arg1: i32, %arg2: i32) -> (i32, i32, i32, i32) {
    %c0_i32 = arith.constant 0 : i32
    %c0_i32_0 = arith.constant 0 : i32
    %c0_i32_1 = arith.constant 0 : i32
    %c0_i32_2 = arith.constant 0 : i32
    return %arg0, %c0_i32, %c0_i32_0, %c0_i32_1 : i32, i32, i32, i32
  }
  func.func @transform_1(%arg0: i32, %arg1: i32, %arg2: i32) -> (i32, i32, i32, i32) {
    %c0_i32 = arith.constant 0 : i32
    %c0_i32_0 = arith.constant 0 : i32
    %c0_i32_1 = arith.constant 0 : i32
    %c0_i32_2 = arith.constant 0 : i32
    return %arg1, %c0_i32, %c0_i32_0, %c0_i32_1 : i32, i32, i32, i32
  }
  func.func @transform_2(%arg0: i32, %arg1: i32, %arg2: i32) -> (i32, i32) {
    %c0_i32 = arith.constant 0 : i32
    %c0_i32_0 = arith.constant 0 : i32
    %c0_i32_1 = arith.constant 0 : i32
    return %c0_i32, %c0_i32_0 : i32, i32
  }
  func.func @transform_3(%arg0: i32, %arg1: i32, %arg2: i32) -> (i32, i32, i32, i32, i32) {
    %c0_i32 = arith.constant 0 : i32
    %c0_i32_0 = arith.constant 0 : i32
    %c0_i32_1 = arith.constant 0 : i32
    return %arg0, %arg2, %arg1, %c0_i32, %c0_i32_0 : i32, i32, i32, i32, i32
  }
}

</mosaic_0001>

<llo_original>
// kernel: upsample_forward.1
$region0: #{upsample_forward.1}
  #allocation0 [shape = 'u32[]', space=smem, size = 0x4, offset = 0x4, fixed_abs, tag = 'smem constant byte address 0x4 - core index']
  #allocation1 [shape = 'u32[144,128]{1,0:T(1,128)}', space=vmem, size = 0x12000, scoped, tag = 'internal scratch']
  %s0 = inlined_call_operand.vmem [shape: f32[2,18,18,4], index: 0, kind: input, shape index: {}]
  %s1 = inlined_call_operand.vmem [shape: f32[2,2,16,4], index: 1, kind: input, shape index: {}]
  %s2 = inlined_call_operand.vmem [shape: f32[1,4], index: 2, kind: input, shape index: {}]
  %s3 = inlined_call_operand.vmem [shape: f32[2,16,2,16,8], index: 3, kind: output, shape index: {}]
  %s4 = sld [smem:[#allocation0]]
  $region79: #{upsample_forward.1} parent=0
    _
  %s6 = ssub.s32 1, %s4
  %s7 = scalar_select 0, %s6, %s4
  $region1: #{upsample_forward.1} parent=0
    #allocation2 [shape = 'u8[131072]{0}', space=vmem, size = 0x20000, scoped, tag = 'output window, operand 0']
    loop: start=0, step=1, limit=10
    $region2: #{upsample_forward.1} parent=1 // loop_pre_header
      _
    $region3: #{upsample_forward.1} parent=1 // loop_header
      %s9 = sphi 0, %s13
      %p10 = scmp.ge.s32.totalorder %s9, 10
      %s16 = sphi 0, %s35
      %s17 = sphi 0, %s31
      %s18 = sphi 0, %s27
      %s19 = sphi 0, %s16
      %s20 = sphi 0, %s17
      %s21 = sphi 0, %s18
      %s22 = sphi 0, %s19
      %s23 = sphi 0, %s20
      %s24 = sphi 0, %s21
      %s38 = sphi 0, %s40
      %s41 = sphi 0, %s38
      %s42 = sphi 0, %s41
      %s58 = sphi 0, %s42
      %s64 = sphi 0, %s66
      %s67 = sphi 0, %s64
      %s68 = sphi 0, %s67
      %s84 = sphi 0, %s68
      %s88 = sphi 0, %s88
      %s90 = sphi 0, %s88
      %s91 = sphi 0, %s90
      %s105 = sphi 0, %s91
      %s115 = sphi 0, %s117
      %s118 = sphi 0, %s115
      %s119 = sphi 0, %s118
      %s135 = sphi 0, %s119
    $region4: #{upsample_forward.1} parent=1 // loop_header_branch
      %12 = sbr.rel (%p10) target = $region8
    $region5: #{upsample_forward.1} parent=1 // loop_body
      %s14 = ssub.s32 %s9, 1
      %s15 = ssub.s32 %s9, 2
      %s25 = sadd.s32 1, %s18
      %p26 = scmp.ge.s32.totalorder %s25, 2
      %s27 = scalar_select %p26, 0, %s25
      %s28 = sadd.s32 1, %s17
      %s29 = scalar_select %p26, %s28, %s17
      %p30 = scmp.ge.s32.totalorder %s29, 2
      %s31 = scalar_select %p30, 0, %s29
      %s32 = sadd.s32 1, %s16
      %s33 = scalar_select %p30, %s32, %s16
      %p34 = scmp.ge.s32.totalorder %s33, 2
      %s35 = scalar_select %p34, 0, %s33
      %s36 = ssub.s32 %s16, %s35
      %p37 = scmp.eq.s32.totalorder %s36, 0
      %s39 = sadd.s32 %s38, 1
      %s40 = scalar_select %p37, %s38, %s39
      %p43 = pneg %p37
      %p44 = scmp.eq.s32.totalorder %s9, 7
      %p45 = por %p43, %p44
      %p46 = scmp.ne.s32.totalorder %s38, %s41
      %p47 = scmp.eq.s32.totalorder %s9, 0
      %p48 = por %p46, %p47
      %p49 = scmp.ne.s32.totalorder %s38, %s41
      %p50 = scmp.eq.s32.totalorder %s14, 7
      %p51 = por %p49, %p50
      %p52 = scmp.ne.s32.totalorder %s41, %s42
      %p53 = scmp.eq.s32.totalorder %s14, 0
      %p54 = por %p52, %p53
      %p55 = scmp.ne.s32.totalorder %s41, %s42
      %p56 = scmp.eq.s32.totalorder %s15, 7
      %p57 = por %p55, %p56
      %p59 = scmp.ne.s32.totalorder %s42, %s58
      %p60 = scmp.eq.s32.totalorder %s15, 0
      %p61 = por %p59, %p60
      %s62 = ssub.s32 %s17, %s31
      %p63 = scmp.eq.s32.totalorder %s62, 0
      %s65 = sadd.s32 %s64, 1
      %s66 = scalar_select %p63, %s64, %s65
      %p69 = pneg %p63
      %p70 = scmp.eq.s32.totalorder %s9, 7
      %p71 = por %p69, %p70
      %p72 = scmp.ne.s32.totalorder %s64, %s67
      %p73 = scmp.eq.s32.totalorder %s9, 0
      %p74 = por %p72, %p73
      %p75 = scmp.ne.s32.totalorder %s64, %s67
      %p76 = scmp.eq.s32.totalorder %s14, 7
      %p77 = por %p75, %p76
      %p78 = scmp.ne.s32.totalorder %s67, %s68
      %p79 = scmp.eq.s32.totalorder %s14, 0
      %p80 = por %p78, %p79
      %p81 = scmp.ne.s32.totalorder %s67, %s68
      %p82 = scmp.eq.s32.totalorder %s15, 7
      %p83 = por %p81, %p82
      %p85 = scmp.ne.s32.totalorder %s68, %s84
      %p86 = scmp.eq.s32.totalorder %s15, 0
      %p87 = por %p85, %p86
      %s89 = sadd.s32 %s88, 1
      %p92 = scmp.eq.s32.totalorder %s9, 7
      %p93 = scmp.ne.s32.totalorder %s88, %s90
      %p94 = scmp.eq.s32.totalorder %s9, 0
      %p95 = por %p93, %p94
      %p96 = scmp.ne.s32.totalorder %s88, %s90
      %p97 = scmp.eq.s32.totalorder %s14, 7
      %p98 = por %p96, %p97
      %p99 = scmp.ne.s32.totalorder %s90, %s91
      %p100 = scmp.eq.s32.totalorder %s14, 0
      %p101 = por %p99, %p100
      %p102 = scmp.ne.s32.totalorder %s90, %s91
      %p103 = scmp.eq.s32.totalorder %s15, 7
      %p104 = por %p102, %p103
      %p106 = scmp.ne.s32.totalorder %s91, %s105
      %p107 = scmp.eq.s32.totalorder %s15, 0
      %p108 = por %p106, %p107
      %s109 = ssub.s32 %s16, %s35
      %s110 = ssub.s32 %s18, %s27
      %s111 = sor.u32 %s109, %s110
      %s112 = ssub.s32 %s17, %s31
      %s113 = sor.u32 %s111, %s112
      %p114 = scmp.eq.s32.totalorder %s113, 0
      %s116 = sadd.s32 %s115, 1
      %s117 = scalar_select %p114, %s115, %s116
      %p120 = pneg %p114
      %p121 = scmp.eq.s32.totalorder %s9, 7
      %p122 = por %p120, %p121
      %p123 = scmp.ne.s32.totalorder %s115, %s118
      %p124 = scmp.eq.s32.totalorder %s9, 0
      %p125 = por %p123, %p124
      %p126 = scmp.ne.s32.totalorder %s115, %s118
      %p127 = scmp.eq.s32.totalorder %s14, 7
      %p128 = por %p126, %p127
      %p129 = scmp.ne.s32.totalorder %s118, %s119
      %p130 = scmp.eq.s32.totalorder %s14, 0
      %p131 = por %p129, %p130
      %p132 = scmp.ne.s32.totalorder %s118, %s119
      %p133 = scmp.eq.s32.totalorder %s15, 7
      %p134 = por %p132, %p133
      %p136 = scmp.ne.s32.totalorder %s119, %s135
      %p137 = scmp.eq.s32.totalorder %s15, 0
      %p138 = por %p136, %p137
      %p139 = scmp.le.s32.totalorder 1, %s9
      %p140 = scmp.lt.s32.totalorder %s9, 9
      %p141 = pnand %p139, %p140
      %p142 = pneg %p141
      // Predicated region
      $region9: #{upsample_forward.1} parent=5 // pred_check
        _
      $region10: #{upsample_forward.1} parent=5 // pred_check_branch
        %144 = sbr.rel (%p141) target = $region12
      $region11: #{upsample_forward.1} parent=5 // pred_region
        %s145 = ssub.s32 %s9, 1
        // Predicated region
        $region13: #{upsample_forward.1} parent=11 // pred_check
          %p146 = pneg %p101
        $region14: #{upsample_forward.1} parent=11 // pred_check_branch
          %148 = sbr.rel (%p146) target = $region16
        $region15: #{upsample_forward.1} parent=11 // pred_region
          _
        $region16: #{upsample_forward.1} parent=11 // pred_fallthru
          _
      $region12: #{upsample_forward.1} parent=5 // pred_fallthru
        _
      %p149 = scmp.lt.s32.totalorder %s9, 8
      // Predicated region
      $region17: #{upsample_forward.1} parent=5 // pred_check
        %p150 = pneg %p149
      $region18: #{upsample_forward.1} parent=5 // pred_check_branch
        %152 = sbr.rel (%p150) target = $region20
      $region19: #{upsample_forward.1} parent=5 // pred_region
        // Predicated region
        $region21: #{upsample_forward.1} parent=19 // pred_check
          %p153 = pneg %p48
        $region22: #{upsample_forward.1} parent=19 // pred_check_branch
          %155 = sbr.rel (%p153) target = $region24
        $region23: #{upsample_forward.1} parent=19 // pred_region
          %p156 = scmp.lt.s32.totalorder %s16, 1
          %s157 = scalar_select %p156, %s16, 1
          %s158 = smul.addr %s157, 54
          %s159 = smul.addr %s158, 8
          %s160 = scalar_lea.vmem %s0, %s159
        $region24: #{upsample_forward.1} parent=19 // pred_fallthru
          _
        // Predicated region
        $region25: #{upsample_forward.1} parent=19 // pred_check
          %p161 = pneg %p74
        $region26: #{upsample_forward.1} parent=19 // pred_check_branch
          %163 = sbr.rel (%p161) target = $region28
        $region27: #{upsample_forward.1} parent=19 // pred_region
          %p164 = scmp.lt.s32.totalorder %s17, 1
          %s165 = scalar_select %p164, %s17, 1
          %s166 = smul.addr %s165, 4
          %s167 = smul.addr %s166, 8
          %s168 = scalar_lea.vmem %s1, %s167
        $region28: #{upsample_forward.1} parent=19 // pred_fallthru
          _
      $region20: #{upsample_forward.1} parent=5 // pred_fallthru
        _
      %p169 = scmp.le.s32.totalorder 1, %s9
      %p170 = scmp.lt.s32.totalorder %s9, 9
      %p171 = pnand %p169, %p170
      %p172 = pneg %p171
      // Predicated region
      $region29: #{upsample_forward.1} parent=5 // pred_check
        _
      $region30: #{upsample_forward.1} parent=5 // pred_check_branch
        %174 = sbr.rel (%p171) target = $region32
      $region31: #{upsample_forward.1} parent=5 // pred_region
        %s175 = ssub.s32 %s9, 1
        %p176 = scmp.lt.s32.totalorder %s19, 1
        %s177 = scalar_select %p176, %s19, 1
        %s178 = smul.addr %s177, 54
        %s179 = smul.addr %s178, 8
        %s180 = scalar_lea.vmem %s0, %s179
        %p181 = pneg %p54
        %p182 = pneg %p51
        %p183 = scmp.lt.s32.totalorder %s20, 1
        %s184 = scalar_select %p183, %s20, 1
        %s185 = smul.addr %s184, 4
        %s186 = smul.addr %s185, 8
        %s187 = scalar_lea.vmem %s1, %s186
        %p188 = pneg %p80
        %p189 = pneg %p77
        %p190 = pneg %p101
        %p191 = pneg %p98
        %p192 = pneg %p131
        %p193 = pneg %p128
        %s194 = sand.u32 %s118, 1
        %s195 = sand.u32 %s118, 1
        %s196 = smul.addr %s195, 128
        %s197 = scalar_lea.vmem [#allocation2], %s196
        %p198 = scmp.lt.s32.totalorder %s19, 1
        %s199 = scalar_select %p198, %s19, 1
        %s200 = smul.addr %s199, 54
        %s201 = smul.addr %s200, 8
        %s202 = scalar_lea.vmem %s0, %s201
        %p203 = scmp.lt.s32.totalorder %s20, 1
        %s204 = scalar_select %p203, %s20, 1
        %s205 = smul.addr %s204, 4
        %s206 = smul.addr %s205, 8
        %s207 = scalar_lea.vmem %s1, %s206
        %s208 = smul.u32 8, %s21
        %s209 = smul.u32 %s21, 8
        %s210 = sadd.s32 %s209, %s20
        %s211 = smul.u32 %s210, 24
        %s212 = scalar_lea.vmem %s202, %s211
        %v213 = vld [vmem:[%s212] sm:$0xff]
        %v214 = vld [vmem:[%s212 + $0x8] sm:$0xff]
        %v215 = vld [vmem:[%s212 + $0x10] sm:$0x3]
        %v216 = vld [vmem:[%s212 + $0x18] sm:$0xff]
        %v217 = vld [vmem:[%s212 + $0x20] sm:$0xff]
        %v218 = vld [vmem:[%s212 + $0x28] sm:$0x3]
        %v219 = vld [vmem:[%s212 + $0x30] sm:$0xff]
        %v220 = vld [vmem:[%s212 + $0x38] sm:$0xff]
        %v221 = vld [vmem:[%s212 + $0x40] sm:$0x3]
        %v222 = vld [vmem:[%s212 + $0x48] sm:$0xff]
        %v223 = vld [vmem:[%s212 + $0x50] sm:$0xff]
        %v224 = vld [vmem:[%s212 + $0x58] sm:$0x3]
        %v225 = vld [vmem:[%s212 + $0x60] sm:$0xff]
        %v226 = vld [vmem:[%s212 + $0x68] sm:$0xff]
        %v227 = vld [vmem:[%s212 + $0x70] sm:$0x3]
        %v228 = vld [vmem:[%s212 + $0x78] sm:$0xff]
        %v229 = vld [vmem:[%s212 + $0x80] sm:$0xff]
        %v230 = vld [vmem:[%s212 + $0x88] sm:$0x3]
        %v231 = vld [vmem:[%s212 + $0x90] sm:$0xff]
        %v232 = vld [vmem:[%s212 + $0x98] sm:$0xff]
        %v233 = vld [vmem:[%s212 + $0xa0] sm:$0x3]
        %v234 = vld [vmem:[%s212 + $0xa8] sm:$0xff]
        %v235 = vld [vmem:[%s212 + $0xb0] sm:$0xff]
        %v236 = vld [vmem:[%s212 + $0xb8] sm:$0x3]
        %v237 = vld [vmem:[%s212 + $0xc0] sm:$0xff]
        %v238 = vld [vmem:[%s212 + $0xc8] sm:$0xff]
        %v239 = vld [vmem:[%s212 + $0xd0] sm:$0x3]
        %v240 = vld [vmem:[%s2] sm:$0x1]
        %vm265 = vcmask 1046528
        %v266 = vrot.slane %v213, 1
        %v267 = vrot.slane %v214, 1
        %v268 = vsel %vm265, %v266, %v267
        %v269 = vrot.slane %v215, 1
        %v270 = vsel %vm265, %v267, %v269
        %v271 = vrot.slane %v216, 1
        %v272 = vrot.slane %v217, 1
        %v273 = vsel %vm265, %v271, %v272
        %v274 = vrot.slane %v218, 1
        %v275 = vsel %vm265, %v272, %v274
        %v276 = vrot.slane %v219, 1
        %v277 = vrot.slane %v220, 1
        %v278 = vsel %vm265, %v276, %v277
        %v279 = vrot.slane %v221, 1
        %v280 = vsel %vm265, %v277, %v279
        %v281 = vrot.slane %v222, 1
        %v282 = vrot.slane %v223, 1
        %v283 = vsel %vm265, %v281, %v282
        %v284 = vrot.slane %v224, 1
        %v285 = vsel %vm265, %v282, %v284
        %v286 = vrot.slane %v225, 1
        %v287 = vrot.slane %v226, 1
        %v288 = vsel %vm265, %v286, %v287
        %v289 = vrot.slane %v227, 1
        %v290 = vsel %vm265, %v287, %v289
        %v291 = vrot.slane %v228, 1
        %v292 = vrot.slane %v229, 1
        %v293 = vsel %vm265, %v291, %v292
        %v294 = vrot.slane %v230, 1
        %v295 = vsel %vm265, %v292, %v294
        %v296 = vrot.slane %v231, 1
        %v297 = vrot.slane %v232, 1
        %v298 = vsel %vm265, %v296, %v297
        %v299 = vrot.slane %v233, 1
        %v300 = vsel %vm265, %v297, %v299
        %v301 = vrot.slane %v234, 1
        %v302 = vrot.slane %v235, 1
        %v303 = vsel %vm265, %v301, %v302
        %v304 = vrot.slane %v236, 1
        %v305 = vsel %vm265, %v302, %v304
        %306 = vrot.lane.b32.xlu0 %v268, 4
        %v307 = vpop.permute.xlu0 %306
        %308 = vrot.lane.b32.xlu0 %v270, 4
        %v309 = vpop.permute.xlu0 %308
        %310 = vrot.lane.b32.xlu0 %v273, 4
        %v311 = vpop.permute.xlu0 %310
        %312 = vrot.lane.b32.xlu0 %v275, 4
        %v313 = vpop.permute.xlu0 %312
        %314 = vrot.lane.b32.xlu0 %v278, 4
        %v315 = vpop.permute.xlu0 %314
        %316 = vrot.lane.b32.xlu0 %v280, 4
        %v317 = vpop.permute.xlu0 %316
        %318 = vrot.lane.b32.xlu0 %v283, 4
        %v319 = vpop.permute.xlu0 %318
        %320 = vrot.lane.b32.xlu0 %v285, 4
        %v321 = vpop.permute.xlu0 %320
        %322 = vrot.lane.b32.xlu0 %v288, 4
        %v323 = vpop.permute.xlu0 %322
        %324 = vrot.lane.b32.xlu0 %v290, 4
        %v325 = vpop.permute.xlu0 %324
        %326 = vrot.lane.b32.xlu0 %v293, 4
        %v327 = vpop.permute.xlu0 %326
        %328 = vrot.lane.b32.xlu0 %v295, 4
        %v329 = vpop.permute.xlu0 %328
        %330 = vrot.lane.b32.xlu0 %v298, 4
        %v331 = vpop.permute.xlu0 %330
        %332 = vrot.lane.b32.xlu0 %v300, 4
        %v333 = vpop.permute.xlu0 %332
        %334 = vrot.lane.b32.xlu0 %v303, 4
        %v335 = vpop.permute.xlu0 %334
        %336 = vrot.lane.b32.xlu0 %v305, 4
        %v337 = vpop.permute.xlu0 %336
        %356 = vrot.lane.b32.xlu0 %v216, 8
        %v357 = vpop.permute.xlu0 %356
        %358 = vrot.lane.b32.xlu0 %v217, 8
        %v359 = vpop.permute.xlu0 %358
        %360 = vrot.lane.b32.xlu0 %v219, 8
        %v361 = vpop.permute.xlu0 %360
        %362 = vrot.lane.b32.xlu0 %v220, 8
        %v363 = vpop.permute.xlu0 %362
        %364 = vrot.lane.b32.xlu0 %v222, 8
        %v365 = vpop.permute.xlu0 %364
        %366 = vrot.lane.b32.xlu0 %v223, 8
        %v367 = vpop.permute.xlu0 %366
        %368 = vrot.lane.b32.xlu0 %v225, 8
        %v369 = vpop.permute.xlu0 %368
        %370 = vrot.lane.b32.xlu0 %v226, 8
        %v371 = vpop.permute.xlu0 %370
        %372 = vrot.lane.b32.xlu0 %v228, 8
        %v373 = vpop.permute.xlu0 %372
        %374 = vrot.lane.b32.xlu0 %v229, 8
        %v375 = vpop.permute.xlu0 %374
        %376 = vrot.lane.b32.xlu0 %v231, 8
        %v377 = vpop.permute.xlu0 %376
        %378 = vrot.lane.b32.xlu0 %v232, 8
        %v379 = vpop.permute.xlu0 %378
        %380 = vrot.lane.b32.xlu0 %v234, 8
        %v381 = vpop.permute.xlu0 %380
        %382 = vrot.lane.b32.xlu0 %v235, 8
        %v383 = vpop.permute.xlu0 %382
        %384 = vrot.lane.b32.xlu0 %v237, 8
        %v385 = vpop.permute.xlu0 %384
        %386 = vrot.lane.b32.xlu0 %v238, 8
        %v387 = vpop.permute.xlu0 %386
        %v405 = vrot.slane %v237, 1
        %v406 = vrot.slane %v238, 1
        %v407 = vsel %vm265, %v405, %v406
        %v408 = vrot.slane %v239, 1
        %v409 = vsel %vm265, %v406, %v408
        %410 = vrot.lane.b32.xlu0 %v273, 12
        %v411 = vpop.permute.xlu0 %410
        %412 = vrot.lane.b32.xlu0 %v275, 12
        %v413 = vpop.permute.xlu0 %412
        %414 = vrot.lane.b32.xlu0 %v278, 12
        %v415 = vpop.permute.xlu0 %414
        %416 = vrot.lane.b32.xlu0 %v280, 12
        %v417 = vpop.permute.xlu0 %416
        %418 = vrot.lane.b32.xlu0 %v283, 12
        %v419 = vpop.permute.xlu0 %418
        %420 = vrot.lane.b32.xlu0 %v285, 12
        %v421 = vpop.permute.xlu0 %420
        %422 = vrot.lane.b32.xlu0 %v288, 12
        %v423 = vpop.permute.xlu0 %422
        %424 = vrot.lane.b32.xlu0 %v290, 12
        %v425 = vpop.permute.xlu0 %424
        %426 = vrot.lane.b32.xlu0 %v293, 12
        %v427 = vpop.permute.xlu0 %426
        %428 = vrot.lane.b32.xlu0 %v295, 12
        %v429 = vpop.permute.xlu0 %428
        %430 = vrot.lane.b32.xlu0 %v298, 12
        %v431 = vpop.permute.xlu0 %430
        %432 = vrot.lane.b32.xlu0 %v300, 12
        %v433 = vpop.permute.xlu0 %432
        %434 = vrot.lane.b32.xlu0 %v303, 12
        %v435 = vpop.permute.xlu0 %434
        %436 = vrot.lane.b32.xlu0 %v305, 12
        %v437 = vpop.permute.xlu0 %436
        %438 = vrot.lane.b32.xlu0 %v407, 12
        %v439 = vpop.permute.xlu0 %438
        %440 = vrot.lane.b32.xlu0 %v409, 12
        %v441 = vpop.permute.xlu0 %440
        %vm458 = vcmask 31744
        %v459 = vsel %vm458, %v213, %v307
        %v460 = vsel %vm458, %v214, %v309
        %v461 = vsel %vm458, %v216, %v311
        %v462 = vsel %vm458, %v217, %v313
        %v463 = vsel %vm458, %v219, %v315
        %v464 = vsel %vm458, %v220, %v317
        %v465 = vsel %vm458, %v222, %v319
        %v466 = vsel %vm458, %v223, %v321
        %v467 = vsel %vm458, %v225, %v323
        %v468 = vsel %vm458, %v226, %v325
        %v469 = vsel %vm458, %v228, %v327
        %v470 = vsel %vm458, %v229, %v329
        %v471 = vsel %vm458, %v231, %v331
        %v472 = vsel %vm458, %v232, %v333
        %v473 = vsel %vm458, %v234, %v335
        %v474 = vsel %vm458, %v235, %v337
        %vm475 = vcmask 64512
        %v476 = vsel %vm475, %v459, %v357
        %v477 = vsel %vm475, %v460, %v359
        %v478 = vsel %vm475, %v461, %v361
        %v479 = vsel %vm475, %v462, %v363
        %v480 = vsel %vm475, %v463, %v365
        %v481 = vsel %vm475, %v464, %v367
        %v482 = vsel %vm475, %v465, %v369
        %v483 = vsel %vm475, %v466, %v371
        %v484 = vsel %vm475, %v467, %v373
        %v485 = vsel %vm475, %v468, %v375
        %v486 = vsel %vm475, %v469, %v377
        %v487 = vsel %vm475, %v470, %v379
        %v488 = vsel %vm475, %v471, %v381
        %v489 = vsel %vm475, %v472, %v383
        %v490 = vsel %vm475, %v473, %v385
        %v491 = vsel %vm475, %v474, %v387
        %vm492 = vcmask 97280
        %v493 = vsel %vm492, %v476, %v411
        %v494 = vsel %vm492, %v477, %v413
        %v495 = vsel %vm492, %v478, %v415
        %v496 = vsel %vm492, %v479, %v417
        %v497 = vsel %vm492, %v480, %v419
        %v498 = vsel %vm492, %v481, %v421
        %v499 = vsel %vm492, %v482, %v423
        %v500 = vsel %vm492, %v483, %v425
        %v501 = vsel %vm492, %v484, %v427
        %v502 = vsel %vm492, %v485, %v429
        %v503 = vsel %vm492, %v486, %v431
        %v504 = vsel %vm492, %v487, %v433
        %v505 = vsel %vm492, %v488, %v435
        %v506 = vsel %vm492, %v489, %v437
        %v507 = vsel %vm492, %v490, %v439
        %v508 = vsel %vm492, %v491, %v441
        %v509 = vld [vmem:[%s207] sm:$0xff]
        %v510 = vld [vmem:[%s207 + $0x8] sm:$0xff]
        %v512 = vlaneseq
        %v513 = vshrl.u32 %v512, 7
        %v514 = vsub.s32 0, %v513
        %v515 = vrot.slane %v240, %v514
        %vm517 = vcmask 130048
        %v519 = vsel %vm517, %v493, 0
        %v522 = vsel %vm517, %v494, 0
        %v525 = vsel %vm517, %v495, 0
        %v528 = vsel %vm517, %v496, 0
        %v531 = vsel %vm517, %v497, 0
        %v534 = vsel %vm517, %v498, 0
        %v537 = vsel %vm517, %v499, 0
        %v540 = vsel %vm517, %v500, 0
        %v543 = vsel %vm517, %v501, 0
        %v546 = vsel %vm517, %v502, 0
        %v549 = vsel %vm517, %v503, 0
        %v552 = vsel %vm517, %v504, 0
        %v555 = vsel %vm517, %v505, 0
        %v558 = vsel %vm517, %v506, 0
        %v561 = vsel %vm517, %v507, 0
        %v564 = vsel %vm517, %v508, 0
        %566 = vmatprep.subr.mxu0 0.0
        %567 = vmatpush1.msra.mxu0 %v509
        %568 = vmatprep.subr.mxu0 0.0
        %569 = vmatpush1.msra.mxu0 %v510
        %570 = vmatprep.subr.mxu0 0.0
        %571 = vmatpush1.msra.mxu0 0.0
        %572 = vmatprep.subr.mxu0 0.0
        %573 = vmatpush1.msra.mxu0 0.0
        %574 = vmatprep.subr.mxu0 0.0
        %575 = vmatpush1.msra.mxu0 0.0
        %576 = vmatprep.subr.mxu0 0.0
        %577 = vmatpush1.msra.mxu0 0.0
        %578 = vmatprep.subr.mxu0 0.0
        %579 = vmatpush1.msra.mxu0 0.0
        %580 = vmatprep.subr.mxu0 0.0
        %581 = vmatpush1.msra.mxu0 0.0
        %582 = vmatprep.subr.mxu0 0.0
        %583 = vmatpush1.msra.mxu0 0.0
        %584 = vmatprep.subr.mxu0 0.0
        %585 = vmatpush1.msra.mxu0 0.0
        %586 = vmatprep.subr.mxu0 0.0
        %587 = vmatpush1.msra.mxu0 0.0
        %588 = vmatprep.subr.mxu0 0.0
        %589 = vmatpush1.msra.mxu0 0.0
        %590 = vmatprep.subr.mxu0 0.0
        %591 = vmatpush1.msra.mxu0 0.0
        %592 = vmatprep.subr.mxu0 0.0
        %593 = vmatpush1.msra.mxu0 0.0
        %594 = vmatprep.subr.mxu0 0.0
        %595 = vmatpush1.msra.mxu0 0.0
        %596 = vmatprep.subr.mxu0 0.0
        %597 = vmatpush1.msra.mxu0 0.0
        %598 = vmatprep.subr.mxu0 0.0
        %599 = vmatpush1.msra.mxu0 0.0
        %600 = vmatprep.subr.mxu0 0.0
        %601 = vmatpush1.msra.mxu0 0.0
        %602 = vmatprep.subr.mxu0 0.0
        %603 = vmatpush1.msra.mxu0 0.0
        %604 = vmatprep.subr.mxu0 0.0
        %605 = vmatpush1.msra.mxu0 0.0
        %606 = vmatprep.subr.mxu0 0.0
        %607 = vmatpush1.msra.mxu0 0.0
        %608 = vmatprep.subr.mxu0 0.0
        %609 = vmatpush1.msra.mxu0 0.0
        %610 = vmatprep.subr.mxu0 0.0
        %611 = vmatpush1.msra.mxu0 0.0
        %612 = vmatprep.subr.mxu0 0.0
        %613 = vmatpush1.msra.mxu0 0.0
        %614 = vmatprep.subr.mxu0 0.0
        %615 = vmatpush1.msra.mxu0 0.0
        %616 = vmatprep.subr.mxu0 0.0
        %617 = vmatpush1.msra.mxu0 0.0
        %618 = vmatprep.subr.mxu0 0.0
        %619 = vmatpush1.msra.mxu0 0.0
        %620 = vmatprep.subr.mxu0 0.0
        %621 = vmatpush1.msra.mxu0 0.0
        %622 = vmatprep.subr.mxu0 0.0
        %623 = vmatpush1.msra.mxu0 0.0
        %624 = vmatprep.subr.mxu0 0.0
        %625 = vmatpush1.msra.mxu0 0.0
        %626 = vmatprep.subr.mxu0 0.0
        %627 = vmatpush1.msra.mxu0 0.0
        %628 = vmatprep.subr.mxu0 0.0
        %629 = vmatpush1.msra.mxu0 0.0
        %630 = vmatprep.mubr.f32.mxu0 0.0
        %631 = vmatmul.mubr.f32.gmra.mrb[0].mxu0 %v519
        %v632 = vpop.f32.mrb[0].mxu0
        %v633 = vadd.f32 %v515, %v632
        %v634 = vpop.f32.mrb[0].mxu0
        %635 = vmatprep.mubr.f32.mxu0 0.0
        %636 = vmatmul.mubr.f32.gmra.mrb[0].mxu0 %v522
        %v637 = vpop.f32.mrb[0].mxu0
        %v638 = vadd.f32 %v515, %v637
        %v639 = vpop.f32.mrb[0].mxu0
        %640 = vmatprep.mubr.f32.mxu0 0.0
        %641 = vmatmul.mubr.f32.gmra.mrb[0].mxu0 %v525
        %v642 = vpop.f32.mrb[0].mxu0
        %v643 = vadd.f32 %v515, %v642
        %v644 = vpop.f32.mrb[0].mxu0
        %645 = vmatprep.mubr.f32.mxu0 0.0
        %646 = vmatmul.mubr.f32.gmra.mrb[0].mxu0 %v528
        %v647 = vpop.f32.mrb[0].mxu0
        %v648 = vadd.f32 %v515, %v647
        %v649 = vpop.f32.mrb[0].mxu0
        %650 = vmatprep.mubr.f32.mxu0 0.0
        %651 = vmatmul.mubr.f32.gmra.mrb[0].mxu0 %v531
        %v652 = vpop.f32.mrb[0].mxu0
        %v653 = vadd.f32 %v515, %v652
        %v654 = vpop.f32.mrb[0].mxu0
        %655 = vmatprep.mubr.f32.mxu0 0.0
        %656 = vmatmul.mubr.f32.gmra.mrb[0].mxu0 %v534
        %v657 = vpop.f32.mrb[0].mxu0
        %v658 = vadd.f32 %v515, %v657
        %v659 = vpop.f32.mrb[0].mxu0
        %660 = vmatprep.mubr.f32.mxu0 0.0
        %661 = vmatmul.mubr.f32.gmra.mrb[0].mxu0 %v537
        %v662 = vpop.f32.mrb[0].mxu0
        %v663 = vadd.f32 %v515, %v662
        %v664 = vpop.f32.mrb[0].mxu0
        %665 = vmatprep.mubr.f32.mxu0 0.0
        %666 = vmatmul.mubr.f32.gmra.mrb[0].mxu0 %v540
        %v667 = vpop.f32.mrb[0].mxu0
        %v668 = vadd.f32 %v515, %v667
        %v669 = vpop.f32.mrb[0].mxu0
        %670 = vmatprep.mubr.f32.mxu0 0.0
        %671 = vmatmul.mubr.f32.gmra.mrb[0].mxu0 %v543
        %v672 = vpop.f32.mrb[0].mxu0
        %v673 = vadd.f32 %v515, %v672
        %v674 = vpop.f32.mrb[0].mxu0
        %675 = vmatprep.mubr.f32.mxu0 0.0
        %676 = vmatmul.mubr.f32.gmra.mrb[0].mxu0 %v546
        %v677 = vpop.f32.mrb[0].mxu0
        %v678 = vadd.f32 %v515, %v677
        %v679 = vpop.f32.mrb[0].mxu0
        %680 = vmatprep.mubr.f32.mxu0 0.0
        %681 = vmatmul.mubr.f32.gmra.mrb[0].mxu0 %v549
        %v682 = vpop.f32.mrb[0].mxu0
        %v683 = vadd.f32 %v515, %v682
        %v684 = vpop.f32.mrb[0].mxu0
        %685 = vmatprep.mubr.f32.mxu0 0.0
        %686 = vmatmul.mubr.f32.gmra.mrb[0].mxu0 %v552
        %v687 = vpop.f32.mrb[0].mxu0
        %v688 = vadd.f32 %v515, %v687
        %v689 = vpop.f32.mrb[0].mxu0
        %690 = vmatprep.mubr.f32.mxu0 0.0
        %691 = vmatmul.mubr.f32.gmra.mrb[0].mxu0 %v555
        %v692 = vpop.f32.mrb[0].mxu0
        %v693 = vadd.f32 %v515, %v692
        %v694 = vpop.f32.mrb[0].mxu0
        %695 = vmatprep.mubr.f32.mxu0 0.0
        %696 = vmatmul.mubr.f32.gmra.mrb[0].mxu0 %v558
        %v697 = vpop.f32.mrb[0].mxu0
        %v698 = vadd.f32 %v515, %v697
        %v699 = vpop.f32.mrb[0].mxu0
        %700 = vmatprep.mubr.f32.mxu0 0.0
        %701 = vmatmul.mubr.f32.gmra.mrb[0].mxu0 %v561
        %v702 = vpop.f32.mrb[0].mxu0
        %v703 = vadd.f32 %v515, %v702
        %v704 = vpop.f32.mrb[0].mxu0
        %705 = vmatprep.mubr.f32.mxu0 0.0
        %706 = vmatmul.mubr.f32.gmra.mrb[0].mxu0 %v564
        %v707 = vpop.f32.mrb[0].mxu0
        %v708 = vadd.f32 %v515, %v707
        %v709 = vpop.f32.mrb[0].mxu0
        %710 = vdwg.mxu0
        %711 = vst.msk [vmem:[%s197] sm:$0xff] %vm458, %v633
        %712 = vst.msk [vmem:[%s197 + $0x8] sm:$0xff] %vm458, %v638
        %713 = vst.msk [vmem:[%s197 + $0x10] sm:$0xff] %vm458, %v643
        %714 = vst.msk [vmem:[%s197 + $0x18] sm:$0xff] %vm458, %v648
        %715 = vst.msk [vmem:[%s197 + $0x20] sm:$0xff] %vm458, %v653
        %716 = vst.msk [vmem:[%s197 + $0x28] sm:$0xff] %vm458, %v658
        %717 = vst.msk [vmem:[%s197 + $0x30] sm:$0xff] %vm458, %v663
        %718 = vst.msk [vmem:[%s197 + $0x38] sm:$0xff] %vm458, %v668
        %719 = vst.msk [vmem:[%s197 + $0x40] sm:$0xff] %vm458, %v673
        %720 = vst.msk [vmem:[%s197 + $0x48] sm:$0xff] %vm458, %v678
        %721 = vst.msk [vmem:[%s197 + $0x50] sm:$0xff] %vm458, %v683
        %722 = vst.msk [vmem:[%s197 + $0x58] sm:$0xff] %vm458, %v688
        %723 = vst.msk [vmem:[%s197 + $0x60] sm:$0xff] %vm458, %v693
        %724 = vst.msk [vmem:[%s197 + $0x68] sm:$0xff] %vm458, %v698
        %725 = vst.msk [vmem:[%s197 + $0x70] sm:$0xff] %vm458, %v703
        %726 = vst.msk [vmem:[%s197 + $0x78] sm:$0xff] %vm458, %v708
        %727 = vrot.lane.b32.xlu0 %v269, 4
        %v728 = vpop.permute.xlu0 %727
        %729 = vrot.lane.b32.xlu0 %v274, 4
        %v730 = vpop.permute.xlu0 %729
        %731 = vrot.lane.b32.xlu0 %v279, 4
        %v732 = vpop.permute.xlu0 %731
        %733 = vrot.lane.b32.xlu0 %v284, 4
        %v734 = vpop.permute.xlu0 %733
        %735 = vrot.lane.b32.xlu0 %v289, 4
        %v736 = vpop.permute.xlu0 %735
        %737 = vrot.lane.b32.xlu0 %v294, 4
        %v738 = vpop.permute.xlu0 %737
        %739 = vrot.lane.b32.xlu0 %v299, 4
        %v740 = vpop.permute.xlu0 %739
        %741 = vrot.lane.b32.xlu0 %v304, 4
        %v742 = vpop.permute.xlu0 %741
        %751 = vrot.lane.b32.xlu0 %v218, 8
        %v752 = vpop.permute.xlu0 %751
        %753 = vrot.lane.b32.xlu0 %v221, 8
        %v754 = vpop.permute.xlu0 %753
        %755 = vrot.lane.b32.xlu0 %v224, 8
        %v756 = vpop.permute.xlu0 %755
        %757 = vrot.lane.b32.xlu0 %v227, 8
        %v758 = vpop.permute.xlu0 %757
        %759 = vrot.lane.b32.xlu0 %v230, 8
        %v760 = vpop.permute.xlu0 %759
        %761 = vrot.lane.b32.xlu0 %v233, 8
        %v762 = vpop.permute.xlu0 %761
        %763 = vrot.lane.b32.xlu0 %v236, 8
        %v764 = vpop.permute.xlu0 %763
        %765 = vrot.lane.b32.xlu0 %v239, 8
        %v766 = vpop.permute.xlu0 %765
        %775 = vrot.lane.b32.xlu0 %v274, 12
        %v776 = vpop.permute.xlu0 %775
        %777 = vrot.lane.b32.xlu0 %v279, 12
        %v778 = vpop.permute.xlu0 %777
        %779 = vrot.lane.b32.xlu0 %v284, 12
        %v780 = vpop.permute.xlu0 %779
        %781 = vrot.lane.b32.xlu0 %v289, 12
        %v782 = vpop.permute.xlu0 %781
        %783 = vrot.lane.b32.xlu0 %v294, 12
        %v784 = vpop.permute.xlu0 %783
        %785 = vrot.lane.b32.xlu0 %v299, 12
        %v786 = vpop.permute.xlu0 %785
        %787 = vrot.lane.b32.xlu0 %v304, 12
        %v788 = vpop.permute.xlu0 %787
        %789 = vrot.lane.b32.xlu0 %v408, 12
        %v790 = vpop.permute.xlu0 %789
        %v799 = vsel %vm458, %v215, %v728
        %v800 = vsel %vm458, %v218, %v730
        %v801 = vsel %vm458, %v221, %v732
        %v802 = vsel %vm458, %v224, %v734
        %v803 = vsel %vm458, %v227, %v736
        %v804 = vsel %vm458, %v230, %v738
        %v805 = vsel %vm458, %v233, %v740
        %v806 = vsel %vm458, %v236, %v742
        %v807 = vsel %vm475, %v799, %v752
        %v808 = vsel %vm475, %v800, %v754
        %v809 = vsel %vm475, %v801, %v756
        %v810 = vsel %vm475, %v802, %v758
        %v811 = vsel %vm475, %v803, %v760
        %v812 = vsel %vm475, %v804, %v762
        %v813 = vsel %vm475, %v805, %v764
        %v814 = vsel %vm475, %v806, %v766
        %v815 = vsel %vm492, %v807, %v776
        %v816 = vsel %vm492, %v808, %v778
        %v817 = vsel %vm492, %v809, %v780
        %v818 = vsel %vm492, %v810, %v782
        %v819 = vsel %vm492, %v811, %v784
        %v820 = vsel %vm492, %v812, %v786
        %v821 = vsel %vm492, %v813, %v788
        %v822 = vsel %vm492, %v814, %v790
        %v831 = vrot.slane %v493, 1
        %v832 = vrot.slane %v494, 1
        %v833 = vsel %vm265, %v831, %v832
        %v834 = vrot.slane %v815, 1
        %v835 = vsel %vm265, %v832, %v834
        %v836 = vrot.slane %v495, 1
        %v837 = vrot.slane %v496, 1
        %v838 = vsel %vm265, %v836, %v837
        %v839 = vrot.slane %v816, 1
        %v840 = vsel %vm265, %v837, %v839
        %v841 = vrot.slane %v497, 1
        %v842 = vrot.slane %v498, 1
        %v843 = vsel %vm265, %v841, %v842
        %v844 = vrot.slane %v817, 1
        %v845 = vsel %vm265, %v842, %v844
        %v846 = vrot.slane %v499, 1
        %v847 = vrot.slane %v500, 1
        %v848 = vsel %vm265, %v846, %v847
        %v849 = vrot.slane %v818, 1
        %v850 = vsel %vm265, %v847, %v849
        %v851 = vrot.slane %v501, 1
        %v852 = vrot.slane %v502, 1
        %v853 = vsel %vm265, %v851, %v852
        %v854 = vrot.slane %v819, 1
        %v855 = vsel %vm265, %v852, %v854
        %v856 = vrot.slane %v503, 1
        %v857 = vrot.slane %v504, 1
        %v858 = vsel %vm265, %v856, %v857
        %v859 = vrot.slane %v820, 1
        %v860 = vsel %vm265, %v857, %v859
        %v861 = vrot.slane %v505, 1
        %v862 = vrot.slane %v506, 1
        %v863 = vsel %vm265, %v861, %v862
        %v864 = vrot.slane %v821, 1
        %v865 = vsel %vm265, %v862, %v864
        %v866 = vrot.slane %v507, 1
        %v867 = vrot.slane %v508, 1
        %v868 = vsel %vm265, %v866, %v867
        %v869 = vrot.slane %v822, 1
        %v870 = vsel %vm265, %v867, %v869
        %s871 = scalar_lea.vmem %s207, 16
        %v872 = vld [vmem:[%s871] sm:$0xff]
        %v873 = vld [vmem:[%s871 + $0x8] sm:$0xff]
        %v874 = vsel %vm517, %v833, 0
        %v876 = vsel %vm517, %v835, 0
        %v878 = vsel %vm517, %v838, 0
        %v880 = vsel %vm517, %v840, 0
        %v882 = vsel %vm517, %v843, 0
        %v884 = vsel %vm517, %v845, 0
        %v886 = vsel %vm517, %v848, 0
        %v888 = vsel %vm517, %v850, 0
        %v890 = vsel %vm517, %v853, 0
        %v892 = vsel %vm517, %v855, 0
        %v894 = vsel %vm517, %v858, 0
        %v896 = vsel %vm517, %v860, 0
        %v898 = vsel %vm517, %v863, 0
        %v900 = vsel %vm517, %v865, 0
        %v902 = vsel %vm517, %v868, 0
        %v904 = vsel %vm517, %v870, 0
        %906 = vmatprep.subr.mxu0 0.0
        %907 = vmatpush1.msra.mxu0 %v872
        %908 = vmatprep.subr.mxu0 0.0
        %909 = vmatpush1.msra.mxu0 %v873
        %910 = vmatprep.subr.mxu0 0.0
        %911 = vmatpush1.msra.mxu0 0.0
        %912 = vmatprep.subr.mxu0 0.0
        %913 = vmatpush1.msra.mxu0 0.0
        %914 = vmatprep.subr.mxu0 0.0
        %915 = vmatpush1.msra.mxu0 0.0
        %916 = vmatprep.subr.mxu0 0.0
        %917 = vmatpush1.msra.mxu0 0.0
        %918 = vmatprep.subr.mxu0 0.0
        %919 = vmatpush1.msra.mxu0 0.0
        %920 = vmatprep.subr.mxu0 0.0
        %921 = vmatpush1.msra.mxu0 0.0
        %922 = vmatprep.subr.mxu0 0.0
        %923 = vmatpush1.msra.mxu0 0.0
        %924 = vmatprep.subr.mxu0 0.0
        %925 = vmatpush1.msra.mxu0 0.0
        %926 = vmatprep.subr.mxu0 0.0
        %927 = vmatpush1.msra.mxu0 0.0
        %928 = vmatprep.subr.mxu0 0.0
        %929 = vmatpush1.msra.mxu0 0.0
        %930 = vmatprep.subr.mxu0 0.0
        %931 = vmatpush1.msra.mxu0 0.0
        %932 = vmatprep.subr.mxu0 0.0
        %933 = vmatpush1.msra.mxu0 0.0
        %934 = vmatprep.subr.mxu0 0.0
        %935 = vmatpush1.msra.mxu0 0.0
        %936 = vmatprep.subr.mxu0 0.0
        %937 = vmatpush1.msra.mxu0 0.0
        %938 = vmatprep.subr.mxu0 0.0
        %939 = vmatpush1.msra.mxu0 0.0
        %940 = vmatprep.subr.mxu0 0.0
        %941 = vmatpush1.msra.mxu0 0.0
        %942 = vmatprep.subr.mxu0 0.0
        %943 = vmatpush1.msra.mxu0 0.0
        %944 = vmatprep.subr.mxu0 0.0
        %945 = vmatpush1.msra.mxu0 0.0
        %946 = vmatprep.subr.mxu0 0.0
        %947 = vmatpush1.msra.mxu0 0.0
        %948 = vmatprep.subr.mxu0 0.0
        %949 = vmatpush1.msra.mxu0 0.0
        %950 = vmatprep.subr.mxu0 0.0
        %951 = vmatpush1.msra.mxu0 0.0
        %952 = vmatprep.subr.mxu0 0.0
        %953 = vmatpush1.msra.mxu0 0.0
        %954 = vmatprep.subr.mxu0 0.0
        %955 = vmatpush1.msra.mxu0 0.0
        %956 = vmatprep.subr.mxu0 0.0
        %957 = vmatpush1.msra.mxu0 0.0
        %958 = vmatprep.subr.mxu0 0.0
        %959 = vmatpush1.msra.mxu0 0.0
        %960 = vmatprep.subr.mxu0 0.0
        %961 = vmatpush1.msra.mxu0 0.0
        %962 = vmatprep.subr.mxu0 0.0
        %963 = vmatpush1.msra.mxu0 0.0
        %964 = vmatprep.subr.mxu0 0.0
        %965 = vmatpush1.msra.mxu0 0.0
        %966 = vmatprep.subr.mxu0 0.0
        %967 = vmatpush1.msra.mxu0 0.0
        %968 = vmatprep.subr.mxu0 0.0
        %969 = vmatpush1.msra.mxu0 0.0
        %970 = vmatprep.mubr.f32.mxu0 0.0
        %971 = vmatmul.mubr.f32.gmra.mrb[0].mxu0 %v874
        %v972 = vpop.f32.mrb[0].mxu0
        %v973 = vadd.f32 %v515, %v972
        %v974 = vpop.f32.mrb[0].mxu0
        %975 = vmatprep.mubr.f32.mxu0 0.0
        %976 = vmatmul.mubr.f32.gmra.mrb[0].mxu0 %v876
        %v977 = vpop.f32.mrb[0].mxu0
        %v978 = vadd.f32 %v515, %v977
        %v979 = vpop.f32.mrb[0].mxu0
        %980 = vmatprep.mubr.f32.mxu0 0.0
        %981 = vmatmul.mubr.f32.gmra.mrb[0].mxu0 %v878
        %v982 = vpop.f32.mrb[0].mxu0
        %v983 = vadd.f32 %v515, %v982
        %v984 = vpop.f32.mrb[0].mxu0
        %985 = vmatprep.mubr.f32.mxu0 0.0
        %986 = vmatmul.mubr.f32.gmra.mrb[0].mxu0 %v880
        %v987 = vpop.f32.mrb[0].mxu0
        %v988 = vadd.f32 %v515, %v987
        %v989 = vpop.f32.mrb[0].mxu0
        %990 = vmatprep.mubr.f32.mxu0 0.0
        %991 = vmatmul.mubr.f32.gmra.mrb[0].mxu0 %v882
        %v992 = vpop.f32.mrb[0].mxu0
        %v993 = vadd.f32 %v515, %v992
        %v994 = vpop.f32.mrb[0].mxu0
        %995 = vmatprep.mubr.f32.mxu0 0.0
        %996 = vmatmul.mubr.f32.gmra.mrb[0].mxu0 %v884
        %v997 = vpop.f32.mrb[0].mxu0
        %v998 = vadd.f32 %v515, %v997
        %v999 = vpop.f32.mrb[0].mxu0
        %1000 = vmatprep.mubr.f32.mxu0 0.0
        %1001 = vmatmul.mubr.f32.gmra.mrb[0].mxu0 %v886
        %v1002 = vpop.f32.mrb[0].mxu0
        %v1003 = vadd.f32 %v515, %v1002
        %v1004 = vpop.f32.mrb[0].mxu0
        %1005 = vmatprep.mubr.f32.mxu0 0.0
        %1006 = vmatmul.mubr.f32.gmra.mrb[0].mxu0 %v888
        %v1007 = vpop.f32.mrb[0].mxu0
        %v1008 = vadd.f32 %v515, %v1007
        %v1009 = vpop.f32.mrb[0].mxu0
        %1010 = vmatprep.mubr.f32.mxu0 0.0
        %1011 = vmatmul.mubr.f32.gmra.mrb[0].mxu0 %v890
        %v1012 = vpop.f32.mrb[0].mxu0
        %v1013 = vadd.f32 %v515, %v1012
        %v1014 = vpop.f32.mrb[0].mxu0
        %1015 = vmatprep.mubr.f32.mxu0 0.0
        %1016 = vmatmul.mubr.f32.gmra.mrb[0].mxu0 %v892
        %v1017 = vpop.f32.mrb[0].mxu0
        %v1018 = vadd.f32 %v515, %v1017
        %v1019 = vpop.f32.mrb[0].mxu0
        %1020 = vmatprep.mubr.f32.mxu0 0.0
        %1021 = vmatmul.mubr.f32.gmra.mrb[0].mxu0 %v894
        %v1022 = vpop.f32.mrb[0].mxu0
        %v1023 = vadd.f32 %v515, %v1022
        %v1024 = vpop.f32.mrb[0].mxu0
        %1025 = vmatprep.mubr.f32.mxu0 0.0
        %1026 = vmatmul.mubr.f32.gmra.mrb[0].mxu0 %v896
        %v1027 = vpop.f32.mrb[0].mxu0
        %v1028 = vadd.f32 %v515, %v1027
        %v1029 = vpop.f32.mrb[0].mxu0
        %1030 = vmatprep.mubr.f32.mxu0 0.0
        %1031 = vmatmul.mubr.f32.gmra.mrb[0].mxu0 %v898
        %v1032 = vpop.f32.mrb[0].mxu0
        %v1033 = vadd.f32 %v515, %v1032
        %v1034 = vpop.f32.mrb[0].mxu0
        %1035 = vmatprep.mubr.f32.mxu0 0.0
        %1036 = vmatmul.mubr.f32.gmra.mrb[0].mxu0 %v900
        %v1037 = vpop.f32.mrb[0].mxu0
        %v1038 = vadd.f32 %v515, %v1037
        %v1039 = vpop.f32.mrb[0].mxu0
        %1040 = vmatprep.mubr.f32.mxu0 0.0
        %1041 = vmatmul.mubr.f32.gmra.mrb[0].mxu0 %v902
        %v1042 = vpop.f32.mrb[0].mxu0
        %v1043 = vadd.f32 %v515, %v1042
        %v1044 = vpop.f32.mrb[0].mxu0
        %1045 = vmatprep.mubr.f32.mxu0 0.0
        %1046 = vmatmul.mubr.f32.gmra.mrb[0].mxu0 %v904
        %v1047 = vpop.f32.mrb[0].mxu0
        %v1048 = vadd.f32 %v515, %v1047
        %v1049 = vpop.f32.mrb[0].mxu0
        %1050 = vdwg.mxu0
        %1067 = vrot.lane.b32.xlu0 %v973, 4
        %v1068 = vpop.permute.xlu0 %1067
        %1069 = vrot.lane.b32.xlu0 %v978, 4
        %v1070 = vpop.permute.xlu0 %1069
        %1071 = vrot.lane.b32.xlu0 %v983, 4
        %v1072 = vpop.permute.xlu0 %1071
        %1073 = vrot.lane.b32.xlu0 %v988, 4
        %v1074 = vpop.permute.xlu0 %1073
        %1075 = vrot.lane.b32.xlu0 %v993, 4
        %v1076 = vpop.permute.xlu0 %1075
        %1077 = vrot.lane.b32.xlu0 %v998, 4
        %v1078 = vpop.permute.xlu0 %1077
        %1079 = vrot.lane.b32.xlu0 %v1003, 4
        %v1080 = vpop.permute.xlu0 %1079
        %1081 = vrot.lane.b32.xlu0 %v1008, 4
        %v1082 = vpop.permute.xlu0 %1081
        %1083 = vrot.lane.b32.xlu0 %v1013, 4
        %v1084 = vpop.permute.xlu0 %1083
        %1085 = vrot.lane.b32.xlu0 %v1018, 4
        %v1086 = vpop.permute.xlu0 %1085
        %1087 = vrot.lane.b32.xlu0 %v1023, 4
        %v1088 = vpop.permute.xlu0 %1087
        %1089 = vrot.lane.b32.xlu0 %v1028, 4
        %v1090 = vpop.permute.xlu0 %1089
        %1091 = vrot.lane.b32.xlu0 %v1033, 4
        %v1092 = vpop.permute.xlu0 %1091
        %1093 = vrot.lane.b32.xlu0 %v1038, 4
        %v1094 = vpop.permute.xlu0 %1093
        %1095 = vrot.lane.b32.xlu0 %v1043, 4
        %v1096 = vpop.permute.xlu0 %1095
        %1097 = vrot.lane.b32.xlu0 %v1048, 4
        %v1098 = vpop.permute.xlu0 %1097
        %vm1115 = vcmask 64544
        %1116 = vst.msk [vmem:[%s197] sm:$0xff] %vm1115, %v1068
        %1117 = vst.msk [vmem:[%s197 + $0x8] sm:$0xff] %vm1115, %v1070
        %1118 = vst.msk [vmem:[%s197 + $0x10] sm:$0xff] %vm1115, %v1072
        %1119 = vst.msk [vmem:[%s197 + $0x18] sm:$0xff] %vm1115, %v1074
        %1120 = vst.msk [vmem:[%s197 + $0x20] sm:$0xff] %vm1115, %v1076
        %1121 = vst.msk [vmem:[%s197 + $0x28] sm:$0xff] %vm1115, %v1078
        %1122 = vst.msk [vmem:[%s197 + $0x30] sm:$0xff] %vm1115, %v1080
        %1123 = vst.msk [vmem:[%s197 + $0x38] sm:$0xff] %vm1115, %v1082
        %1124 = vst.msk [vmem:[%s197 + $0x40] sm:$0xff] %vm1115, %v1084
        %1125 = vst.msk [vmem:[%s197 + $0x48] sm:$0xff] %vm1115, %v1086
        %1126 = vst.msk [vmem:[%s197 + $0x50] sm:$0xff] %vm1115, %v1088
        %1127 = vst.msk [vmem:[%s197 + $0x58] sm:$0xff] %vm1115, %v1090
        %1128 = vst.msk [vmem:[%s197 + $0x60] sm:$0xff] %vm1115, %v1092
        %1129 = vst.msk [vmem:[%s197 + $0x68] sm:$0xff] %vm1115, %v1094
        %1130 = vst.msk [vmem:[%s197 + $0x70] sm:$0xff] %vm1115, %v1096
        %1131 = vst.msk [vmem:[%s197 + $0x78] sm:$0xff] %vm1115, %v1098
        %s1132 = sand.u32 %s118, 1
        %s1133 = sand.u32 %s118, 1
        %s1134 = smul.addr %s1133, 128
        %s1135 = scalar_lea.vmem [#allocation2], %s1134
        // Predicated region
        $region33: #{upsample_forward.1} parent=31 // pred_check
          %p1136 = pneg %p128
        $region34: #{upsample_forward.1} parent=31 // pred_check_branch
          %1138 = sbr.rel (%p1136) target = $region36
        $region35: #{upsample_forward.1} parent=31 // pred_region
          %s1139 = smul.u32 8, %s21
          %s1140 = smul.addr %s20, 2
          %s1141 = smul.addr %s1139, 4
          %s1142 = sadd.s32 %s1140, %s1141
          %s1143 = smul.addr %s19, 64
          %s1144 = sadd.s32 %s1142, %s1143
          %s1145 = smul.addr %s1144, 8
          %s1146 = scalar_lea.vmem %s3, %s1145
          // Predicated region
          $region37: #{upsample_forward.1} parent=35 // pred_check
            _
          $region38: #{upsample_forward.1} parent=35 // pred_check_branch
            %1148 = sbr.rel (0) target = $region40
          $region39: #{upsample_forward.1} parent=35 // pred_region
            // Predicated region
            $region41: #{upsample_forward.1} parent=39 // pred_check
              _
            $region42: #{upsample_forward.1} parent=39 // pred_check_branch
              %1150 = sbr.rel (0) target = $region44
            $region43: #{upsample_forward.1} parent=39 // pred_region
              // Predicated region
              $region56: #{upsample_forward.1} parent=43 // pred_check
                _
              $region57: #{upsample_forward.1} parent=43 // pred_check_branch
                %1195 = sbr.rel (0) target = $region59
              $region58: #{upsample_forward.1} parent=43 // pred_region
                loop: start=0, step=1, limit=1
                $region60: #{upsample_forward.1} parent=58 // loop_pre_header
                  _
                $region61: #{upsample_forward.1} parent=58 // loop_header
                  %s1197 = sphi 0, %s1201
                  %p1198 = scmp.ge.s32.totalorder %s1197, 1
                  %s1202 = sphi %s1135, %s1135
                  %s1203 = sphi %s1146, %s1146
                $region62: #{upsample_forward.1} parent=58 // loop_header_branch
                  %1200 = sbr.rel (%p1198) target = $region66
                $region63: #{upsample_forward.1} parent=58 // loop_body
                  %v1204 = vld [vmem:[%s1202] sm:$0xff]
                  %1205 = vst [vmem:[%s1203] sm:$0xff] %v1204
                  %v1206 = vld [vmem:[%s1202 + $0x8] sm:$0xff]
                  %1207 = vst [vmem:[%s1203 + $0x8] sm:$0xff] %v1206
                  %v1208 = vld [vmem:[%s1202 + $0x10] sm:$0xff]
                  %1209 = vst [vmem:[%s1203 + $0x20] sm:$0xff] %v1208
                  %v1210 = vld [vmem:[%s1202 + $0x18] sm:$0xff]
                  %1211 = vst [vmem:[%s1203 + $0x28] sm:$0xff] %v1210
                  %v1212 = vld [vmem:[%s1202 + $0x20] sm:$0xff]
                  %1213 = vst [vmem:[%s1203 + $0x40] sm:$0xff] %v1212
                  %v1214 = vld [vmem:[%s1202 + $0x28] sm:$0xff]
                  %1215 = vst [vmem:[%s1203 + $0x48] sm:$0xff] %v1214
                  %v1216 = vld [vmem:[%s1202 + $0x30] sm:$0xff]
                  %1217 = vst [vmem:[%s1203 + $0x60] sm:$0xff] %v1216
                  %v1218 = vld [vmem:[%s1202 + $0x38] sm:$0xff]
                  %1219 = vst [vmem:[%s1203 + $0x68] sm:$0xff] %v1218
                  %v1220 = vld [vmem:[%s1202 + $0x40] sm:$0xff]
                  %1221 = vst [vmem:[%s1203 + $0x80] sm:$0xff] %v1220
                  %v1222 = vld [vmem:[%s1202 + $0x48] sm:$0xff]
                  %1223 = vst [vmem:[%s1203 + $0x88] sm:$0xff] %v1222
                  %v1224 = vld [vmem:[%s1202 + $0x50] sm:$0xff]
                  %1225 = vst [vmem:[%s1203 + $0xa0] sm:$0xff] %v1224
                  %v1226 = vld [vmem:[%s1202 + $0x58] sm:$0xff]
                  %1227 = vst [vmem:[%s1203 + $0xa8] sm:$0xff] %v1226
                  %v1228 = vld [vmem:[%s1202 + $0x60] sm:$0xff]
                  %1229 = vst [vmem:[%s1203 + $0xc0] sm:$0xff] %v1228
                  %v1230 = vld [vmem:[%s1202 + $0x68] sm:$0xff]
                  %1231 = vst [vmem:[%s1203 + $0xc8] sm:$0xff] %v1230
                  %v1232 = vld [vmem:[%s1202 + $0x70] sm:$0xff]
                  %1233 = vst [vmem:[%s1203 + $0xe0] sm:$0xff] %v1232
                  %v1234 = vld [vmem:[%s1202 + $0x78] sm:$0xff]
                  %1235 = vst [vmem:[%s1203 + $0xe8] sm:$0xff] %v1234
                $region64: #{upsample_forward.1} parent=58 // loop_footer
                  %s1201 = sadd.s32 1, %s1197
                $region65: #{upsample_forward.1} parent=58 // loop_footer_branch
                  %1196 = sbr.rel target = $region61
                $region66: #{upsample_forward.1} parent=58 // loop_exit
                  _
              $region59: #{upsample_forward.1} parent=43 // pred_fallthru
                _
              // Predicated region
              $region67: #{upsample_forward.1} parent=43 // pred_check
                _
              $region68: #{upsample_forward.1} parent=43 // pred_check_branch
                %1237 = sbr.rel target = $region70
              $region69: #{upsample_forward.1} parent=43 // pred_region
                _
              $region70: #{upsample_forward.1} parent=43 // pred_fallthru
                _
            $region44: #{upsample_forward.1} parent=39 // pred_fallthru
              _
            // Predicated region
            $region45: #{upsample_forward.1} parent=39 // pred_check
              _
            $region46: #{upsample_forward.1} parent=39 // pred_check_branch
              %1152 = sbr.rel target = $region48
            $region47: #{upsample_forward.1} parent=39 // pred_region
              loop: start=0, step=1, limit=1
              $region49: #{upsample_forward.1} parent=47 // loop_pre_header
                _
              $region50: #{upsample_forward.1} parent=47 // loop_header
                %s1155 = sphi 0, %s1159
                %p1156 = scmp.ge.s32.totalorder %s1155, 1
                %s1160 = sphi %s1135, %s1135
                %s1161 = sphi %s1146, %s1146
              $region51: #{upsample_forward.1} parent=47 // loop_header_branch
                %1158 = sbr.rel (%p1156) target = $region55
              $region52: #{upsample_forward.1} parent=47 // loop_body
                %v1162 = vld [vmem:[%s1160] sm:$0xff]
                %1163 = vst [vmem:[%s1161] sm:$0xff] %v1162
                %v1164 = vld [vmem:[%s1160 + $0x8] sm:$0xff]
                %1165 = vst [vmem:[%s1161 + $0x8] sm:$0xff] %v1164
                %v1166 = vld [vmem:[%s1160 + $0x10] sm:$0xff]
                %1167 = vst [vmem:[%s1161 + $0x20] sm:$0xff] %v1166
                %v1168 = vld [vmem:[%s1160 + $0x18] sm:$0xff]
                %1169 = vst [vmem:[%s1161 + $0x28] sm:$0xff] %v1168
                %v1170 = vld [vmem:[%s1160 + $0x20] sm:$0xff]
                %1171 = vst [vmem:[%s1161 + $0x40] sm:$0xff] %v1170
                %v1172 = vld [vmem:[%s1160 + $0x28] sm:$0xff]
                %1173 = vst [vmem:[%s1161 + $0x48] sm:$0xff] %v1172
                %v1174 = vld [vmem:[%s1160 + $0x30] sm:$0xff]
                %1175 = vst [vmem:[%s1161 + $0x60] sm:$0xff] %v1174
                %v1176 = vld [vmem:[%s1160 + $0x38] sm:$0xff]
                %1177 = vst [vmem:[%s1161 + $0x68] sm:$0xff] %v1176
                %v1178 = vld [vmem:[%s1160 + $0x40] sm:$0xff]
                %1179 = vst [vmem:[%s1161 + $0x80] sm:$0xff] %v1178
                %v1180 = vld [vmem:[%s1160 + $0x48] sm:$0xff]
                %1181 = vst [vmem:[%s1161 + $0x88] sm:$0xff] %v1180
                %v1182 = vld [vmem:[%s1160 + $0x50] sm:$0xff]
                %1183 = vst [vmem:[%s1161 + $0xa0] sm:$0xff] %v1182
                %v1184 = vld [vmem:[%s1160 + $0x58] sm:$0xff]
                %1185 = vst [vmem:[%s1161 + $0xa8] sm:$0xff] %v1184
                %v1186 = vld [vmem:[%s1160 + $0x60] sm:$0xff]
                %1187 = vst [vmem:[%s1161 + $0xc0] sm:$0xff] %v1186
                %v1188 = vld [vmem:[%s1160 + $0x68] sm:$0xff]
                %1189 = vst [vmem:[%s1161 + $0xc8] sm:$0xff] %v1188
                %v1190 = vld [vmem:[%s1160 + $0x70] sm:$0xff]
                %1191 = vst [vmem:[%s1161 + $0xe0] sm:$0xff] %v1190
                %v1192 = vld [vmem:[%s1160 + $0x78] sm:$0xff]
                %1193 = vst [vmem:[%s1161 + $0xe8] sm:$0xff] %v1192
              $region53: #{upsample_forward.1} parent=47 // loop_footer
                %s1159 = sadd.s32 1, %s1155
              $region54: #{upsample_forward.1} parent=47 // loop_footer_branch
                %1154 = sbr.rel target = $region50
              $region55: #{upsample_forward.1} parent=47 // loop_exit
                _
            $region48: #{upsample_forward.1} parent=39 // pred_fallthru
              _
          $region40: #{upsample_forward.1} parent=35 // pred_fallthru
            _
          %1238 = vnop
        $region36: #{upsample_forward.1} parent=31 // pred_fallthru
          _
      $region32: #{upsample_forward.1} parent=5 // pred_fallthru
        _
      %p1239 = scmp.le.s32.totalorder 2, %s9
      // Predicated region
      $region71: #{upsample_forward.1} parent=5 // pred_check
        %p1240 = pneg %p1239
      $region72: #{upsample_forward.1} parent=5 // pred_check_branch
        %1242 = sbr.rel (%p1240) target = $region74
      $region73: #{upsample_forward.1} parent=5 // pred_region
        %s1243 = ssub.s32 %s9, 2
        // Predicated region
        $region75: #{upsample_forward.1} parent=73 // pred_check
          %p1244 = pneg %p134
        $region76: #{upsample_forward.1} parent=73 // pred_check_branch
          %1246 = sbr.rel (%p1244) target = $region78
        $region77: #{upsample_forward.1} parent=73 // pred_region
          %s1247 = sand.u32 %s119, 1
          %s1248 = sand.u32 %s119, 1
          %s1249 = smul.addr %s1248, 128
          %s1250 = scalar_lea.vmem [#allocation2], %s1249
        $region78: #{upsample_forward.1} parent=73 // pred_fallthru
          _
      $region74: #{upsample_forward.1} parent=5 // pred_fallthru
        _
    $region6: #{upsample_forward.1} parent=1 // loop_footer
      %s13 = sadd.s32 1, %s9
    $region7: #{upsample_forward.1} parent=1 // loop_footer_branch
      %8 = sbr.rel target = $region3
    $region8: #{upsample_forward.1} parent=1 // loop_exit
      _

</llo_original>
